<compile_context>
chip_gen: v7x
topology: tpu7x:2x2x1
jax: 0.10.0
libtpu: 0.0.40
codegen_flags: <defaults>
</compile_context>

<pallas_src>
import jax
import jax.numpy as jnp
from jax.experimental import pallas as pl
from jax.experimental.pallas import tpu as pltpu

# Hyper-params implied by the argparse options in the original script.
# TODO(synk): LRELU_A should match the actual opt.lrelu_a (0.2 is the common
# GAN choice; PyTorch's LeakyReLU default would be 0.01).
LRELU_A = 0.2          # opt.lrelu_a
CHANNELS = 1           # opt.channels
IMG_SIZE = 16          # opt.img_size
IN_DIM = CHANNELS * IMG_SIZE * IMG_SIZE   # prod(img_shape) = 256
HIDDEN = 128

TB_MAX = 2048          # max batch-tile rows; 2048x256 f32 = 2 MB (4 MB dbl-buffered)


def _discriminator_kernel(x_ref, w1_ref, b1_ref, w2_ref, b2_ref, o_ref):
    """One batch tile: matmul -> bias -> leaky relu -> row-dot -> sigmoid."""
    # Cast the streamed f32 activations (and resident f32 weights) to bf16 on
    # the VPU — free under DMA slack; MXU accumulation stays f32.
    x = x_ref[...].astype(jnp.bfloat16)                        # [TB, IN_DIM]
    w1 = w1_ref[...].astype(jnp.bfloat16)                      # [IN_DIM, HIDDEN]
    h = jnp.dot(x, w1, preferred_element_type=jnp.float32)     # [TB, HIDDEN] f32
    h = h + b1_ref[...]
    # LeakyReLU (VPU).
    h = jnp.where(h > 0, h, LRELU_A * h)
    # Linear 2 has out_features == 1: VPU multiply + lane reduction instead of
    # a degenerate N=1 MXU matmul.
    logit = jnp.sum(h * w2_ref[...], axis=-1) + b2_ref[0]      # [TB]
    # Sigmoid: exp and reciprocal both land on the (otherwise idle) EUP slot.
    val = pl.reciprocal(1.0 + jnp.exp(-logit), approx=True)    # [TB]
    # Lane-dense store: the TB results sit along the 128-lane axis.
    o_ref[...] = val.reshape(o_ref.shape)                      # [1, 1, TB]


def _round_up(x, m):
    return ((x + m - 1) // m) * m


@jax.jit
def discriminator_forward(img, w1, b1, w2, b2):
    """img: [B, C, H, W] float32 (NCHW, like PyTorch). Returns validity [B, 1]."""
    B = img.shape[0]
    # Flatten exactly like torch's .view(B, -1) on contiguous NCHW.  No dtype
    # cast here — the kernel casts on the VPU, so x is read from HBM only once.
    x = img.reshape(B, -1)                                    # [B, IN_DIM] f32
    w1f = w1.astype(jnp.float32)                              # [IN_DIM, HIDDEN]
    b1f = b1.astype(jnp.float32).reshape(1, HIDDEN)           # [1, HIDDEN]
    w2t = w2.astype(jnp.float32).reshape(1, HIDDEN)           # row vector for VPU mul
    b2f = b2.astype(jnp.float32).reshape(1)                   # SMEM scalar

    # Batch tile: as large as useful (amortizes ~0.35us/step overhead), but
    # clamped so the grid has >= 2 steps when B allows it — keeps both v7x
    # TensorCores busy via the "parallel" batch axis.  Multiple of 16 for
    # bf16 sublane packing; Pallas handles the ragged last x block.
    TB = min(TB_MAX, _round_up(max(1, (B + 1) // 2), 16))
    grid_n = pl.cdiv(B, TB)

    out = pl.pallas_call(
        _discriminator_kernel,
        out_shape=jax.ShapeDtypeStruct((grid_n, 1, TB), jnp.float32),
        grid=(grid_n,),
        in_specs=[
            pl.BlockSpec((TB, IN_DIM), lambda i: (i, 0)),       # x: streams over batch
            pl.BlockSpec((IN_DIM, HIDDEN), lambda i: (0, 0)),   # weights stay resident
            pl.BlockSpec((1, HIDDEN), lambda i: (0, 0)),
            pl.BlockSpec((1, HIDDEN), lambda i: (0, 0)),
            pl.BlockSpec(memory_space=pltpu.MemorySpace.SMEM),  # b2 scalar in SMEM
        ],
        out_specs=pl.BlockSpec((1, 1, TB), lambda i: (i, 0, 0)),  # lane-dense tile
        compiler_params=pltpu.CompilerParams(
            dimension_semantics=("parallel",)),   # shards batch tiles across v7x's 2 TCs
    )(x, w1f, b1f, w2t, b2f)

    # [grid_n, 1, TB] -> [B, 1] (padded tail rows, if any, are sliced away).
    return out.reshape(grid_n * TB)[:B].reshape(B, 1)


def init_params(key):
    """Deterministic init matching the torch Linear shapes (stored transposed
    so the kernel can do x @ W)."""
    k1, k2, k3, k4 = jax.random.split(key, 4)
    lim1 = 1.0 / jnp.sqrt(IN_DIM)
    lim2 = 1.0 / jnp.sqrt(HIDDEN)
    w1 = jax.random.uniform(k1, (IN_DIM, HIDDEN), jnp.float32, -lim1, lim1)
    b1 = jax.random.uniform(k2, (1, HIDDEN), jnp.float32, -lim1, lim1)
    w2 = jax.random.uniform(k3, (HIDDEN, 1), jnp.float32, -lim2, lim2)
    b2 = jax.random.uniform(k4, (1, 1), jnp.float32, -lim2, lim2)
    return w1, b1, w2, b2


def _reference(img, w1, b1, w2, b2):
    """Pure-JAX reference matching the kernel's bf16 first-matmul numerics."""
    B = img.shape[0]
    x_flat = img.reshape(B, -1)
    x_bf = x_flat.astype(jnp.bfloat16).astype(jnp.float32)
    w1_bf = w1.astype(jnp.bfloat16).astype(jnp.float32)
    h = x_bf @ w1_bf + b1
    h = jnp.where(h > 0, h, LRELU_A * h)
    return jax.nn.sigmoid(h @ w2 + b2)


if __name__ == "__main__":
    key = jax.random.PRNGKey(0)
    k_img, k_img2, k_params = jax.random.split(key, 3)

    w1, b1, w2, b2 = init_params(k_params)

    # Small required check: B=2 (single ragged tile).
    B = 2
    img = jax.random.normal(k_img, (B, CHANNELS, IMG_SIZE, IMG_SIZE), jnp.float32)
    out = discriminator_forward(img, w1, b1, w2, b2)
    jax.block_until_ready(out)
    ref = _reference(img, w1, b1, w2, b2)
    assert out.shape == (B, 1)
    assert jnp.allclose(out, ref, atol=2e-3, rtol=2e-3), (out, ref)

    # Multi-tile + ragged-last-block path (grid_n == 2).
    B2 = 40
    img2 = jax.random.normal(k_img2, (B2, CHANNELS, IMG_SIZE, IMG_SIZE), jnp.float32)
    out2 = discriminator_forward(img2, w1, b1, w2, b2)
    jax.block_until_ready(out2)
    ref2 = _reference(img2, w1, b1, w2, b2)
    assert out2.shape == (B2, 1)
    assert jnp.allclose(out2, ref2, atol=2e-3, rtol=2e-3), (out2, ref2)

    print("KERNEL_OK")
</pallas_src>

<mosaic_0001>
module attributes {stable_mosaic.version = 11 : i64} {
  func.func @_discriminator_kernel(%arg0: i32, %arg1: memref<16x256xf32, #tpu.memory_space<vmem>>, %arg2: memref<256x128xf32, #tpu.memory_space<vmem>>, %arg3: memref<1x128xf32, #tpu.memory_space<vmem>>, %arg4: memref<1x128xf32, #tpu.memory_space<vmem>>, %arg5: memref<1xf32, #tpu.memory_space<smem>>, %arg6: memref<1x1x16xf32, #tpu.memory_space<vmem>>) attributes {dimension_semantics = [#tpu.dimension_semantics<parallel>], iteration_bounds = array<i64: 1>, scalar_prefetch = 0 : i64, scratch_operands = 0 : i64, tpu.core_type = #tpu.core_type<tc>, window_params = [{transform_indices = @transform_0, window_bounds = array<i64: 16, 256>}, {pipeline_mode = #tpu.pipeline_mode<synchronous>, transform_indices = @transform_1, window_bounds = array<i64: 256, 128>}, {pipeline_mode = #tpu.pipeline_mode<synchronous>, transform_indices = @transform_2, window_bounds = array<i64: 1, 128>}, {pipeline_mode = #tpu.pipeline_mode<synchronous>, transform_indices = @transform_3, window_bounds = array<i64: 1, 128>}, {transform_indices = @transform_4, window_bounds = array<i64: 1>}, {transform_indices = @transform_5, window_bounds = array<i64: 1, 1, 16>}]} {
    %c0 = arith.constant 0 : index
    %c0_0 = arith.constant 0 : index
    %0 = vector.load %arg1[%c0, %c0_0] : memref<16x256xf32, #tpu.memory_space<vmem>>, vector<16x256xf32>
    %1 = arith.truncf %0 : vector<16x256xf32> to vector<16x256xbf16>
    %c0_1 = arith.constant 0 : index
    %c0_2 = arith.constant 0 : index
    %2 = vector.load %arg2[%c0_1, %c0_2] : memref<256x128xf32, #tpu.memory_space<vmem>>, vector<256x128xf32>
    %3 = arith.truncf %2 : vector<256x128xf32> to vector<256x128xbf16>
    %cst = arith.constant dense<0.000000e+00> : vector<16x128xf32>
    %4 = tpu.matmul %1, %3, %cst {dimension_numbers = #tpu.dot_dimension_numbers<[1], [0], [0], [1], [0, 0, 1, 1], [], []>} : vector<16x256xbf16>, vector<256x128xbf16>, vector<16x128xf32> -> vector<16x128xf32>
    %c0_3 = arith.constant 0 : index
    %c0_4 = arith.constant 0 : index
    %5 = vector.load %arg3[%c0_3, %c0_4] : memref<1x128xf32, #tpu.memory_space<vmem>>, vector<1x128xf32>
    %6 = vector.broadcast %5 : vector<1x128xf32> to vector<16x128xf32>
    %7 = arith.addf %4, %6 : vector<16x128xf32>
    %cst_5 = arith.constant 0.000000e+00 : f32
    %8 = vector.broadcast %cst_5 : f32 to vector<16x128xf32>
    %9 = arith.cmpf ogt, %7, %8 : vector<16x128xf32>
    %cst_6 = arith.constant 2.000000e-01 : f32
    %10 = vector.broadcast %cst_6 : f32 to vector<16x128xf32>
    %11 = arith.mulf %10, %7 : vector<16x128xf32>
    %12 = arith.select %9, %7, %11 : vector<16x128xi1>, vector<16x128xf32>
    %c0_7 = arith.constant 0 : index
    %c0_8 = arith.constant 0 : index
    %13 = vector.load %arg4[%c0_7, %c0_8] : memref<1x128xf32, #tpu.memory_space<vmem>>, vector<1x128xf32>
    %14 = vector.broadcast %13 : vector<1x128xf32> to vector<16x128xf32>
    %15 = arith.mulf %12, %14 : vector<16x128xf32>
    %cst_9 = arith.constant dense<0.000000e+00> : vector<16xf32>
    %16 = vector.multi_reduction <add>, %15, %cst_9 [1] : vector<16x128xf32> to vector<16xf32>
    %c0_10 = arith.constant 0 : index
    %17 = memref.load %arg5[%c0_10] : memref<1xf32, #tpu.memory_space<smem>>
    %18 = vector.broadcast %17 : f32 to vector<16xf32>
    %19 = arith.addf %16, %18 : vector<16xf32>
    %cst_11 = arith.constant 0.000000e+00 : f32
    %20 = vector.broadcast %cst_11 : f32 to vector<16xf32>
    %21 = arith.subf %20, %19 : vector<16xf32>
    %22 = math.exp %21 : vector<16xf32>
    %cst_12 = arith.constant 1.000000e+00 : f32
    %23 = vector.broadcast %cst_12 : f32 to vector<16xf32>
    %24 = arith.addf %23, %22 : vector<16xf32>
    %25 = tpu.reciprocal %24 {approx = true} : vector<16xf32> -> vector<16xf32>
    %26 = vector.shape_cast %25 : vector<16xf32> to vector<1x1x16xf32>
    %c0_13 = arith.constant 0 : index
    %c0_14 = arith.constant 0 : index
    %c0_15 = arith.constant 0 : index
    %27 = vector.load %arg6[%c0_13, %c0_14, %c0_15] : memref<1x1x16xf32, #tpu.memory_space<vmem>>, vector<1x1x16xf32>
    tpu.vector_store %arg6[%c0_13, %c0_14, %c0_15], %26 {strides = array<i32>} : memref<1x1x16xf32, #tpu.memory_space<vmem>>, vector<1x1x16xf32>,
    return
  }
  func.func @transform_0(%arg0: i32) -> (i32, i32) {
    %c0_i32 = arith.constant 0 : i32
    %c0_i32_0 = arith.constant 0 : i32
    return %arg0, %c0_i32 : i32, i32
  }
  func.func @transform_1(%arg0: i32) -> (i32, i32) {
    %c0_i32 = arith.constant 0 : i32
    %c0_i32_0 = arith.constant 0 : i32
    %c0_i32_1 = arith.constant 0 : i32
    return %c0_i32, %c0_i32_0 : i32, i32
  }
  func.func @transform_2(%arg0: i32) -> (i32, i32) {
    %c0_i32 = arith.constant 0 : i32
    %c0_i32_0 = arith.constant 0 : i32
    %c0_i32_1 = arith.constant 0 : i32
    return %c0_i32, %c0_i32_0 : i32, i32
  }
  func.func @transform_3(%arg0: i32) -> (i32, i32) {
    %c0_i32 = arith.constant 0 : i32
    %c0_i32_0 = arith.constant 0 : i32
    %c0_i32_1 = arith.constant 0 : i32
    return %c0_i32, %c0_i32_0 : i32, i32
  }
  func.func @transform_4(%arg0: i32) -> i32 {
    %c0_i32 = arith.constant 0 : i32
    %c0_i32_0 = arith.constant 0 : i32
    return %c0_i32 : i32
  }
  func.func @transform_5(%arg0: i32) -> (i32, i32, i32) {
    %c0_i32 = arith.constant 0 : i32
    %c0_i32_0 = arith.constant 0 : i32
    %c0_i32_1 = arith.constant 0 : i32
    return %arg0, %c0_i32, %c0_i32_0 : i32, i32, i32
  }
}

</mosaic_0001>

<llo_original>
// kernel: discriminator_forward.1
$region0: #{discriminator_forward.1}
  #allocation0 [shape = 'u32[]', space=smem, size = 0x4, offset = 0x4, fixed_abs, tag = 'smem constant byte address 0x4 - core index']
  #allocation1 [shape = 'u32[144,128]{1,0:T(1,128)}', space=vmem, size = 0x12000, scoped, tag = 'internal scratch']
  #allocation2 [shape = 'f32[1]{0:T(128)S(6)}', space=smem, size = 0x200, scoped, tag = 'scoped memory for discriminator_forward.1']
  %s0 = inlined_call_operand.vmem [shape: f32[2,256], index: 0, kind: input, shape index: {}]
  %s1 = inlined_call_operand.hbm [shape: f32[256,128], index: 1, kind: input, shape index: {}]
  %s2 = inlined_call_operand.vmem [shape: f32[1,128], index: 2, kind: input, shape index: {}]
  %s3 = inlined_call_operand.vmem [shape: f32[1,128], index: 3, kind: input, shape index: {}]
  %s4 = inlined_call_operand.<no memory space> [shape: f32[1], index: 4, kind: input, shape index: {}]
  %s5 = inlined_call_operand.vmem [shape: f32[1,1,16], index: 5, kind: output, shape index: {}]
  %s6 = sld [smem:[#allocation0]]
  $region34: #{discriminator_forward.1} parent=0
    _
  %s8 = ssub.s32 1, %s6
  %s9 = scalar_select 0, %s8, %s6
  %10 = sst [smem:[#allocation2]] %s4
  $region1: #{discriminator_forward.1} parent=0
    #allocation3 [shape = 'u8[131072]{0}', space=vmem, size = 0x20000, scoped, tag = 'input window, operand 1, single buffered']
    #allocation4 [shape = 's32[1]{0}', space=sflag, size = 0x4, scoped, tag = 'scoped memory for discriminator_forward.1']
    %11 = vsyncpa [#allocation4], 0
    // Predicated region
    $region2: #{discriminator_forward.1} parent=1 // pred_check
      _
    $region3: #{discriminator_forward.1} parent=1 // pred_check_branch
      %13 = sbr.rel (0) target = $region5
    $region4: #{discriminator_forward.1} parent=1 // pred_region
      _
    $region5: #{discriminator_forward.1} parent=1 // pred_fallthru
      _
    // Predicated region
    $region6: #{discriminator_forward.1} parent=1 // pred_check
      _
    $region7: #{discriminator_forward.1} parent=1 // pred_check_branch
      %15 = sbr.rel (0) target = $region9
    $region8: #{discriminator_forward.1} parent=1 // pred_region
      %s17 = ssub.s32 4096, 4096
      %18 = vsyncadd [#allocation4], %s17
      %s19 = sshll.u32 [#allocation3], 4
      %s20 = int_to_ptr.vmem [resolvable:$true] %s19
      %25 = dma.hbm_to_vmem [thread:$0]  %s1, 4096, %s20, [#allocation4], 128, 128, 8
    $region9: #{discriminator_forward.1} parent=1 // pred_fallthru
      _
    // Predicated region
    $region10: #{discriminator_forward.1} parent=1 // pred_check
      _
    $region11: #{discriminator_forward.1} parent=1 // pred_check_branch
      %27 = sbr.rel (0) target = $region13
    $region12: #{discriminator_forward.1} parent=1 // pred_region
      _
    $region13: #{discriminator_forward.1} parent=1 // pred_fallthru
      _
    // Predicated region
    $region14: #{discriminator_forward.1} parent=1 // pred_check
      _
    $region15: #{discriminator_forward.1} parent=1 // pred_check_branch
      %29 = sbr.rel (0) target = $region17
    $region16: #{discriminator_forward.1} parent=1 // pred_region
      _
    $region17: #{discriminator_forward.1} parent=1 // pred_fallthru
      _
    // Predicated region
    $region18: #{discriminator_forward.1} parent=1 // pred_check
      _
    $region19: #{discriminator_forward.1} parent=1 // pred_check_branch
      %31 = sbr.rel (0) target = $region21
    $region20: #{discriminator_forward.1} parent=1 // pred_region
      _
    $region21: #{discriminator_forward.1} parent=1 // pred_fallthru
      _
    // Predicated region
    $region22: #{discriminator_forward.1} parent=1 // pred_check
      _
    $region23: #{discriminator_forward.1} parent=1 // pred_check_branch
      %33 = sbr.rel (0) target = $region25
    $region24: #{discriminator_forward.1} parent=1 // pred_region
      %34 = dma.done [#allocation4], 4096
    $region25: #{discriminator_forward.1} parent=1 // pred_fallthru
      _
    %v36 = vld [vmem:[%s0] sm:$0xf]
    %v37 = vld [vmem:[%s0 + $0x4] sm:$0xf]
    %v38 = vld [vmem:[%s0 + $0x8] sm:$0xf]
    %v39 = vld [vmem:[%s0 + $0xc] sm:$0xf]
    %v40 = vld [vmem:[%s0 + $0x10] sm:$0xf]
    %v41 = vld [vmem:[%s0 + $0x14] sm:$0xf]
    %v42 = vld [vmem:[%s0 + $0x18] sm:$0xf]
    %v43 = vld [vmem:[%s0 + $0x1c] sm:$0xf]
    %v52 = vcombine.low %v36, %v37
    %v53 = vcombine.low %v38, %v39
    %v55 = vunpack.c.l.s4 1983009808
    %v56 = vunpack.c.0.s8 %v55
    %v57 = vlaneseq
    %v58 = vshrl.u32 %v57, 7
    %v59 = vsub.s32 %v56, %v58
    %v60 = vrot.slane %v52, %v59
    %v62 = vunpack.c.l.s4 1983009808
    %v63 = vunpack.c.0.s8 %v62
    %v64 = vlaneseq
    %v65 = vshrl.u32 %v64, 7
    %v66 = vsub.s32 %v63, %v65
    %v67 = vrot.slane %v53, %v66
    %v68 = vcombine.low %v60, %v67
    %v69 = vcombine.high %v60, %v67
    %v70 = vcombine.low %v40, %v41
    %v71 = vcombine.low %v42, %v43
    %v73 = vunpack.c.l.s4 1983009808
    %v74 = vunpack.c.0.s8 %v73
    %v75 = vlaneseq
    %v76 = vshrl.u32 %v75, 7
    %v77 = vsub.s32 %v74, %v76
    %v78 = vrot.slane %v70, %v77
    %v80 = vunpack.c.l.s4 1983009808
    %v81 = vunpack.c.0.s8 %v80
    %v82 = vlaneseq
    %v83 = vshrl.u32 %v82, 7
    %v84 = vsub.s32 %v81, %v83
    %v85 = vrot.slane %v71, %v84
    %v86 = vcombine.low %v78, %v85
    %v87 = vcombine.high %v78, %v85
    %v92 = vpack.c.bf16 %v86, %v68
    %v93 = vpack.c.bf16 %v87, %v69
    %v94 = vld [vmem:[#allocation3] sm:$0xff]
    %v95 = vld [vmem:[#allocation3 + $0x8] sm:$0xff]
    %v96 = vld [vmem:[#allocation3 + $0x10] sm:$0xff]
    %v97 = vld [vmem:[#allocation3 + $0x18] sm:$0xff]
    %v98 = vld [vmem:[#allocation3 + $0x20] sm:$0xff]
    %v99 = vld [vmem:[#allocation3 + $0x28] sm:$0xff]
    %v100 = vld [vmem:[#allocation3 + $0x30] sm:$0xff]
    %v101 = vld [vmem:[#allocation3 + $0x38] sm:$0xff]
    %v102 = vld [vmem:[#allocation3 + $0x40] sm:$0xff]
    %v103 = vld [vmem:[#allocation3 + $0x48] sm:$0xff]
    %v104 = vld [vmem:[#allocation3 + $0x50] sm:$0xff]
    %v105 = vld [vmem:[#allocation3 + $0x58] sm:$0xff]
    %v106 = vld [vmem:[#allocation3 + $0x60] sm:$0xff]
    %v107 = vld [vmem:[#allocation3 + $0x68] sm:$0xff]
    %v108 = vld [vmem:[#allocation3 + $0x70] sm:$0xff]
    %v109 = vld [vmem:[#allocation3 + $0x78] sm:$0xff]
    %v110 = vld [vmem:[#allocation3 + $0x80] sm:$0xff]
    %v111 = vld [vmem:[#allocation3 + $0x88] sm:$0xff]
    %v112 = vld [vmem:[#allocation3 + $0x90] sm:$0xff]
    %v113 = vld [vmem:[#allocation3 + $0x98] sm:$0xff]
    %v114 = vld [vmem:[#allocation3 + $0xa0] sm:$0xff]
    %v115 = vld [vmem:[#allocation3 + $0xa8] sm:$0xff]
    %v116 = vld [vmem:[#allocation3 + $0xb0] sm:$0xff]
    %v117 = vld [vmem:[#allocation3 + $0xb8] sm:$0xff]
    %v118 = vld [vmem:[#allocation3 + $0xc0] sm:$0xff]
    %v119 = vld [vmem:[#allocation3 + $0xc8] sm:$0xff]
    %v120 = vld [vmem:[#allocation3 + $0xd0] sm:$0xff]
    %v121 = vld [vmem:[#allocation3 + $0xd8] sm:$0xff]
    %v122 = vld [vmem:[#allocation3 + $0xe0] sm:$0xff]
    %v123 = vld [vmem:[#allocation3 + $0xe8] sm:$0xff]
    %v124 = vld [vmem:[#allocation3 + $0xf0] sm:$0xff]
    %v125 = vld [vmem:[#allocation3 + $0xf8] sm:$0xff]
    %v126 = vpack.c.bf16 %v95, %v94
    %v127 = vpack.c.bf16 %v97, %v96
    %v128 = vpack.c.bf16 %v99, %v98
    %v129 = vpack.c.bf16 %v101, %v100
    %v130 = vpack.c.bf16 %v103, %v102
    %v131 = vpack.c.bf16 %v105, %v104
    %v132 = vpack.c.bf16 %v107, %v106
    %v133 = vpack.c.bf16 %v109, %v108
    %v134 = vpack.c.bf16 %v111, %v110
    %v135 = vpack.c.bf16 %v113, %v112
    %v136 = vpack.c.bf16 %v115, %v114
    %v137 = vpack.c.bf16 %v117, %v116
    %v138 = vpack.c.bf16 %v119, %v118
    %v139 = vpack.c.bf16 %v121, %v120
    %v140 = vpack.c.bf16 %v123, %v122
    %v141 = vpack.c.bf16 %v125, %v124
    %v142 = vld [vmem:[%s2] sm:$0x1]
    %v144 = vlaneseq
    %v145 = vshrl.u32 %v144, 7
    %v146 = vsub.s32 0, %v145
    %v147 = vrot.slane %v142, %v146
    %149 = vmatprep.subr.bf16.mxu0 0
    %150 = vmatpush1.bf16.msra.mxu0 %v126
    %151 = vmatprep.subr.bf16.mxu0 0
    %152 = vmatpush1.bf16.msra.mxu0 %v127
    %153 = vmatprep.subr.bf16.mxu0 0
    %154 = vmatpush1.bf16.msra.mxu0 %v128
    %155 = vmatprep.subr.bf16.mxu0 0
    %156 = vmatpush1.bf16.msra.mxu0 %v129
    %157 = vmatprep.subr.bf16.mxu0 0
    %158 = vmatpush1.bf16.msra.mxu0 %v130
    %159 = vmatprep.subr.bf16.mxu0 0
    %160 = vmatpush1.bf16.msra.mxu0 %v131
    %161 = vmatprep.subr.bf16.mxu0 0
    %162 = vmatpush1.bf16.msra.mxu0 %v132
    %163 = vmatprep.subr.bf16.mxu0 0
    %164 = vmatpush1.bf16.msra.mxu0 %v133
    %165 = vmatprep.subr.bf16.mxu0 0
    %166 = vmatpush1.bf16.msra.mxu0 %v134
    %167 = vmatprep.subr.bf16.mxu0 0
    %168 = vmatpush1.bf16.msra.mxu0 %v135
    %169 = vmatprep.subr.bf16.mxu0 0
    %170 = vmatpush1.bf16.msra.mxu0 %v136
    %171 = vmatprep.subr.bf16.mxu0 0
    %172 = vmatpush1.bf16.msra.mxu0 %v137
    %173 = vmatprep.subr.bf16.mxu0 0
    %174 = vmatpush1.bf16.msra.mxu0 %v138
    %175 = vmatprep.subr.bf16.mxu0 0
    %176 = vmatpush1.bf16.msra.mxu0 %v139
    %177 = vmatprep.subr.bf16.mxu0 0
    %178 = vmatpush1.bf16.msra.mxu0 %v140
    %179 = vmatprep.subr.bf16.mxu0 0
    %180 = vmatpush1.bf16.msra.mxu0 %v141
    %181 = vmatprep.mubr.bf16.mxu0 %v93
    %182 = vmatmul.mubr.bf16.gmra.mrb[0].mxu0 %v92
    %v183 = vpop.f32.mrb[0].mxu0
    %v184 = vadd.f32 %v147, %v183
    %v185 = vpop.f32.mrb[0].mxu0
    %v186 = vpop.f32.mrb[0].mxu0
    %v187 = vadd.f32 %v147, %v186
    %v188 = vpop.f32.mrb[0].mxu0
    %189 = vdwg.mxu0
    %vm190 = vcmp.gt.f32.partialorder %v184, 0.0
    %vm191 = vcmp.gt.f32.partialorder %v187, 0.0
    %v192 = vmul.f32 %v184, 0.2
    %v193 = vmul.f32 %v187, 0.2
    %v194 = vsel %vm190, %v184, %v192
    %v195 = vsel %vm191, %v187, %v193
    %v196 = vld [vmem:[%s3] sm:$0x1]
    %v198 = vlaneseq
    %v199 = vshrl.u32 %v198, 7
    %v200 = vsub.s32 0, %v199
    %v201 = vrot.slane %v196, %v200
    %v203 = vmul.f32 %v194, %v201
    %v204 = vmul.f32 %v195, %v201
    %205 = vadd.xlane.f32.xlu0 %v203
    %v206 = vpop.xlane.xlu0 %205
    %207 = vadd.xlane.f32.xlu0 %v204
    %v208 = vpop.xlane.xlu0 %207
    %s209 = sld [smem:[#allocation2]]
    %v210 = vstv %s209
    %v211 = vadd.f32 %v206, %v210
    %v212 = vadd.f32 %v208, %v210
    %v213 = vsub.f32 0.0, %v211
    %v214 = vsub.f32 0.0, %v212
    %v215 = vmul.f32 %v213, 1.442695
    %v216 = vpow.pop %v215
    %v217 = vmul.f32 %v214, 1.442695
    %v218 = vpow.pop %v217
    %v219 = vadd.f32 %v216, 1.0
    %v220 = vadd.f32 %v218, 1.0
    %v221 = vrcp.pop %v219
    %v222 = vrcp.pop %v220
    %v225 = vlaneseq
    %v226 = vand.u32 %v225, 127
    %v227 = vlaneseq
    %v228 = vshrl.u32 %v227, 7
    %v229 = vsub.s32 %v226, %v228
    %v230 = vrot.slane %v221, %v229
    %v231 = vadd.s32 %v226, 4294967288
    %v232 = vlaneseq
    %v233 = vshrl.u32 %v232, 7
    %v234 = vsub.s32 %v231, %v233
    %v235 = vrot.slane %v222, %v234
    %vm236 = vcmask 130112
    %v237 = vsel %vm236, %v235, %v230
    %vm239 = vcmask 122880
    %240 = vst.msk [vmem:[%s5] sm:$0x1] %vm239, %v237
    // Predicated region
    $region26: #{discriminator_forward.1} parent=1 // pred_check
      _
    $region27: #{discriminator_forward.1} parent=1 // pred_check_branch
      %242 = sbr.rel (0) target = $region29
    $region28: #{discriminator_forward.1} parent=1 // pred_region
      _
    $region29: #{discriminator_forward.1} parent=1 // pred_fallthru
      _
    // Predicated region
    $region30: #{discriminator_forward.1} parent=1 // pred_check
      _
    $region31: #{discriminator_forward.1} parent=1 // pred_check_branch
      %244 = sbr.rel (0) target = $region33
    $region32: #{discriminator_forward.1} parent=1 // pred_region
      _
    $region33: #{discriminator_forward.1} parent=1 // pred_fallthru
      _
    %245 = vsyncpa [#allocation4], 1

</llo_original>
